<compile_context>
chip_gen: v7x
topology: tpu7x:2x2x1
jax: 0.10.0
libtpu: 0.0.40
codegen_flags: <defaults>
</compile_context>

<pallas_src>
import functools
import math

import jax
import jax.numpy as jnp
from jax.experimental import pallas as pl
from jax.experimental.pallas import tpu as pltpu

_LANE = 128


def _round_up(x, m):
    return ((x + m - 1) // m) * m


def _vmem_capacity_bytes():
    try:
        return int(pltpu.get_tpu_info().vmem_capacity_bytes)
    except Exception:
        return 64 << 20                       # conservative (v7x) fallback


def _choose_tiling(rows, bytes_per_row, max_block_bytes, allow_split):
    """Pick (tile_rows, num_splits, tiles_per_split, rows_padded).

    `rows` are 128-lane rows of the flattened spatial dim.  Prefers a tile that
    divides `rows` exactly (no HBM pad copy); only pads when no multiple-of-8
    divisor fits the VMEM budget."""
    max_rows = max(8, (max_block_bytes // max(bytes_per_row, 1)) // 8 * 8)
    if rows <= max_rows:
        return rows, 1, 1, rows               # single full block, no pad
    tile_rows = 0
    d = max_rows
    while d >= 8:                             # largest multiple-of-8 divisor
        if rows % d == 0:
            tile_rows = d
            break
        d -= 8
    if tile_rows:
        n_tiles = rows // tile_rows
        if allow_split and n_tiles % 2 == 0:
            return tile_rows, 2, n_tiles // 2, rows   # 2-way split, no pad
        return tile_rows, 1, n_tiles, rows
    tile_rows = max_rows                      # ragged: minimal zero-pad
    n_tiles = -(-rows // tile_rows)
    return tile_rows, 1, n_tiles, n_tiles * tile_rows


def _dice_partial_kernel(pred_ref, tar_ref, inter_ref, psum_ref, tsum_ref,
                         *, c, p, sig_consts):
    """One (N, C, tile_rows, 128) spatial tile: fused channel-argmax selecting
    pre-computed sigmoid(k) constants, then per-lane partial sums accumulated
    in the resident output blocks (zeroed at step 0 of each split)."""
    j = pl.program_id(1)

    @pl.when(j == 0)
    def _():
        inter_ref[...] = jnp.zeros_like(inter_ref)
        psum_ref[...] = jnp.zeros_like(psum_ref)
        tsum_ref[...] = jnp.zeros_like(tsum_ref)

    tar = tar_ref[...].astype(jnp.float32)            # (N, R, 128)

    # Single-pass argmax over C; strict '>' keeps the FIRST maximum (matches
    # torch.argmax tie-break).  We carry the constant sigmoid(k) directly: no
    # iota, no int->float cast, no per-element transcendental.
    m = pred_ref[:, 0, :, :].astype(jnp.float32)      # (N, R, 128)
    prob = jnp.full_like(m, sig_consts[0])
    for k in range(1, c):
        x = pred_ref[:, k, :, :].astype(jnp.float32)
        upd = x > m
        m = jnp.where(upd, x, m)
        prob = jnp.where(upd, sig_consts[k], prob)

    if p == 1:                                        # trace-time special case
        prob_p, tar_p = prob, tar
    else:
        prob_p, tar_p = prob ** p, tar ** p

    # Per-lane partials: sublane reduce per step, lane reduce once in XLA.
    inter_ref[...] += jnp.sum(prob * tar, axis=1)[None]
    psum_ref[...] += jnp.sum(prob_p, axis=1)[None]
    tsum_ref[...] += jnp.sum(tar_p, axis=1)[None]


def dice_loss(pred_nchw, tar_n1hw, smooth=1e-05, p=1, *,
              max_block_bytes=None, split_cores=True):
    """pred_nchw: (N, C, H, W) logits (any float dtype); tar_n1hw: (N, 1, H, W)."""
    n, c, h, w = pred_nchw.shape
    hw = h * w

    pred_it = jnp.dtype(pred_nchw.dtype).itemsize
    tar_it = jnp.dtype(tar_n1hw.dtype).itemsize

    vmem_cap = _vmem_capacity_bytes()
    if max_block_bytes is None:
        # pred+tar single-buffer budget; x2 double-buffering stays comfortably
        # inside every generation's VMEM (v7x: 64 MiB physical).
        max_block_bytes = min(8 << 20, vmem_cap // 6)

    rows = _round_up(hw, _LANE) // _LANE
    bytes_per_row = _LANE * n * (c * pred_it + tar_it)
    tile_rows, ns, t, rows_padded = _choose_tiling(
        rows, bytes_per_row, max_block_bytes, allow_split=split_cores)
    hw_padded = rows_padded * _LANE

    # Native-layout reshapes are free (row-major compatible); the zero-pad
    # copy only happens for ragged shapes no multiple-of-8 tile divides.
    pred = pred_nchw.reshape(n, c, hw)
    tar = tar_n1hw.reshape(n, hw)
    if hw_padded != hw:
        pad = hw_padded - hw
        pred = jnp.pad(pred, ((0, 0), (0, 0), (0, pad)))
        tar = jnp.pad(tar, ((0, 0), (0, pad)))
    pred = pred.reshape(n, c, rows_padded, _LANE)
    tar = tar.reshape(n, rows_padded, _LANE)

    # sigmoid(k) for the C possible argmax values, baked in as constants.
    sig_consts = tuple(float(1.0 / (1.0 + math.exp(-k))) for k in range(c))

    kernel = functools.partial(_dice_partial_kernel, c=c, p=p,
                               sig_consts=sig_consts)

    # Double-buffered block footprint (sublane-padded) -> explicit VMEM limit.
    pred_blk = n * c * _round_up(tile_rows, max(8, 32 // pred_it)) * _LANE * pred_it
    tar_blk = n * _round_up(tile_rows, max(8, 32 // tar_it)) * _LANE * tar_it
    required = 2 * (pred_blk + tar_blk) + (2 << 20)
    vmem_limit = int(min(max(required, 32 << 20), int(vmem_cap * 0.9)))

    part_shape = jax.ShapeDtypeStruct((ns, n, _LANE), jnp.float32)
    part_spec = pl.BlockSpec((1, n, _LANE), lambda s, j: (s, 0, 0))

    inter_p, psum_p, tsum_p = pl.pallas_call(
        kernel,
        out_shape=(part_shape, part_shape, part_shape),
        grid_spec=pltpu.PrefetchScalarGridSpec(
            num_scalar_prefetch=0,
            grid=(ns, t),
            in_specs=[
                pl.BlockSpec((n, c, tile_rows, _LANE),
                             lambda s, j: (0, 0, s * t + j, 0)),
                pl.BlockSpec((n, tile_rows, _LANE),
                             lambda s, j: (0, s * t + j, 0)),
            ],
            out_specs=(part_spec, part_spec, part_spec),
        ),
        compiler_params=pltpu.CompilerParams(
            dimension_semantics=("parallel", "arbitrary"),
            vmem_limit_bytes=vmem_limit),
    )(pred, tar)

    # Tiny finalize in XLA: cross-core/lane reduce, pad correction, dice, mean.
    inter = jnp.sum(inter_p, axis=(0, 2))             # (N,)
    psum = jnp.sum(psum_p, axis=(0, 2))
    tsum = jnp.sum(tsum_p, axis=(0, 2))
    pad_elems = hw_padded - hw
    if pad_elems:
        # Zero-padded logits argmax to channel 0 -> prob = sigmoid(0); padded
        # tar is zero, so only sum(prob**p) needs a constant fix-up.
        psum = psum - (sig_consts[0] ** p) * float(pad_elems)
    num = 2.0 * inter + smooth
    den = psum + tsum + smooth
    return jnp.mean(1.0 - num / den)


def dice_loss_ref(pred_nchw, tar_n1hw, smooth=1e-05, p=1):
    n = pred_nchw.shape[0]
    arg = jnp.argmax(pred_nchw, axis=1, keepdims=True)
    pred_f = arg.reshape(n, -1).astype(jnp.float32)
    tar_f = tar_n1hw.reshape(n, -1).astype(jnp.float32)
    prob = jax.nn.sigmoid(pred_f)
    num = 2.0 * jnp.sum(prob * tar_f, axis=1) + smooth
    den = jnp.sum(prob ** p + tar_f ** p, axis=1) + smooth
    return jnp.mean(1.0 - num / den)


if __name__ == "__main__":
    key = jax.random.PRNGKey(0)
    k1, k2, k3, k4, k5, k6 = jax.random.split(key, 6)

    # Case 1: module-spec small shapes (single block, no split, no padding).
    N, C, H, W = 2, 4, 16, 16
    pred = jax.random.normal(k1, (N, C, H, W), dtype=jnp.float32)
    tar = jax.random.bernoulli(k2, 0.5, (N, 1, H, W)).astype(jnp.float32)
    out = dice_loss(pred, tar)
    jax.block_until_ready(out)
    ref = dice_loss_ref(pred, tar)
    assert jnp.allclose(out, ref, atol=1e-5, rtol=1e-5), (out, ref)

    # Case 2: forced small tiles -> multi-tile reduction + 2-way "parallel"
    # split (v7x dual-core path), bf16 logits and p != 1.
    N2, C2, H2, W2 = 2, 5, 64, 64                    # rows = 32 -> 4 tiles of 8
    pred2 = jax.random.normal(k3, (N2, C2, H2, W2), dtype=jnp.bfloat16)
    tar2 = jax.random.bernoulli(k4, 0.3, (N2, 1, H2, W2)).astype(jnp.float32)
    out2 = dice_loss(pred2, tar2, p=2, max_block_bytes=8 * 1024)
    jax.block_until_ready(out2)
    ref2 = dice_loss_ref(pred2, tar2, p=2)
    assert jnp.allclose(out2, ref2, atol=1e-4, rtol=1e-4), (out2, ref2)

    # Case 3: rows (=18) has no multiple-of-8 divisor under the forced budget
    # -> exercises the zero-pad + finalize psum-correction path.
    N3, C3, H3, W3 = 2, 3, 48, 48
    pred3 = jax.random.normal(k5, (N3, C3, H3, W3), dtype=jnp.float32)
    tar3 = jax.random.bernoulli(k6, 0.5, (N3, 1, H3, W3)).astype(jnp.float32)
    out3 = dice_loss(pred3, tar3, max_block_bytes=8 * 1024)
    jax.block_until_ready(out3)
    ref3 = dice_loss_ref(pred3, tar3)
    assert jnp.allclose(out3, ref3, atol=1e-5, rtol=1e-5), (out3, ref3)

    print("KERNEL_OK")
</pallas_src>

<mosaic_0001>
module attributes {stable_mosaic.version = 11 : i64} {
  func.func @_dice_partial_kernel(%arg0: i32, %arg1: i32, %arg2: memref<2x4x2x128xf32, #tpu.memory_space<vmem>>, %arg3: memref<2x2x128xf32, #tpu.memory_space<vmem>>, %arg4: memref<1x2x128xf32, #tpu.memory_space<vmem>>, %arg5: memref<1x2x128xf32, #tpu.memory_space<vmem>>, %arg6: memref<1x2x128xf32, #tpu.memory_space<vmem>>) attributes {dimension_semantics = [#tpu.dimension_semantics<parallel>, #tpu.dimension_semantics<arbitrary>], iteration_bounds = array<i64: 1, 1>, scalar_prefetch = 0 : i64, scratch_operands = 0 : i64, tpu.core_type = #tpu.core_type<tc>, window_params = [{transform_indices = @transform_0, window_bounds = array<i64: 2, 4, 2, 128>}, {transform_indices = @transform_1, window_bounds = array<i64: 2, 2, 128>}, {transform_indices = @transform_2, window_bounds = array<i64: 1, 2, 128>}, {transform_indices = @transform_3, window_bounds = array<i64: 1, 2, 128>}, {transform_indices = @transform_4, window_bounds = array<i64: 1, 2, 128>}]} {
    %c0_i32 = arith.constant 0 : i32
    %0 = arith.cmpi eq, %arg1, %c0_i32 : i32
    %1 = arith.extui %0 : i1 to i32
    %c0_i32_0 = arith.constant 0 : i32
    %2 = arith.cmpi ne, %1, %c0_i32_0 : i32
    scf.if %2 {
      %cst_40 = arith.constant 0.000000e+00 : f32
      %40 = vector.broadcast %cst_40 : f32 to vector<1x2x128xf32>
      %c0_41 = arith.constant 0 : index
      %c0_42 = arith.constant 0 : index
      %c0_43 = arith.constant 0 : index
      %41 = vector.load %arg4[%c0_41, %c0_42, %c0_43] : memref<1x2x128xf32, #tpu.memory_space<vmem>>, vector<1x2x128xf32>
      tpu.vector_store %arg4[%c0_41, %c0_42, %c0_43], %40 {strides = array<i32>} : memref<1x2x128xf32, #tpu.memory_space<vmem>>, vector<1x2x128xf32>,
      %cst_44 = arith.constant 0.000000e+00 : f32
      %42 = vector.broadcast %cst_44 : f32 to vector<1x2x128xf32>
      %c0_45 = arith.constant 0 : index
      %c0_46 = arith.constant 0 : index
      %c0_47 = arith.constant 0 : index
      %43 = vector.load %arg5[%c0_45, %c0_46, %c0_47] : memref<1x2x128xf32, #tpu.memory_space<vmem>>, vector<1x2x128xf32>
      tpu.vector_store %arg5[%c0_45, %c0_46, %c0_47], %42 {strides = array<i32>} : memref<1x2x128xf32, #tpu.memory_space<vmem>>, vector<1x2x128xf32>,
      %cst_48 = arith.constant 0.000000e+00 : f32
      %44 = vector.broadcast %cst_48 : f32 to vector<1x2x128xf32>
      %c0_49 = arith.constant 0 : index
      %c0_50 = arith.constant 0 : index
      %c0_51 = arith.constant 0 : index
      %45 = vector.load %arg6[%c0_49, %c0_50, %c0_51] : memref<1x2x128xf32, #tpu.memory_space<vmem>>, vector<1x2x128xf32>
      tpu.vector_store %arg6[%c0_49, %c0_50, %c0_51], %44 {strides = array<i32>} : memref<1x2x128xf32, #tpu.memory_space<vmem>>, vector<1x2x128xf32>,
    } else {
    }
    %c0 = arith.constant 0 : index
    %c0_1 = arith.constant 0 : index
    %c0_2 = arith.constant 0 : index
    %3 = vector.load %arg3[%c0, %c0_1, %c0_2] : memref<2x2x128xf32, #tpu.memory_space<vmem>>, vector<2x2x128xf32>
    %c0_3 = arith.constant 0 : index
    %c0_4 = arith.constant 0 : index
    %c0_5 = arith.constant 0 : index
    %c0_6 = arith.constant 0 : index
    %4 = vector.load %arg2[%c0_3, %c0_4, %c0_5, %c0_6] : memref<2x4x2x128xf32, #tpu.memory_space<vmem>>, vector<2x1x2x128xf32>
    %5 = vector.shape_cast %4 : vector<2x1x2x128xf32> to vector<2x2x128xf32>
    %cst = arith.constant 5.000000e-01 : f32
    %6 = vector.broadcast %cst : f32 to vector<2x2x128xf32>
    %c0_7 = arith.constant 0 : index
    %c1 = arith.constant 1 : index
    %c0_8 = arith.constant 0 : index
    %c0_9 = arith.constant 0 : index
    %7 = vector.load %arg2[%c0_7, %c1, %c0_8, %c0_9] : memref<2x4x2x128xf32, #tpu.memory_space<vmem>>, vector<2x1x2x128xf32>
    %8 = vector.shape_cast %7 : vector<2x1x2x128xf32> to vector<2x2x128xf32>
    %9 = arith.cmpf ogt, %8, %5 : vector<2x2x128xf32>
    %10 = arith.select %9, %8, %5 : vector<2x2x128xi1>, vector<2x2x128xf32>
    %cst_10 = arith.constant 0.731058597 : f32
    %11 = vector.broadcast %cst_10 : f32 to vector<2x2x128xf32>
    %12 = arith.select %9, %11, %6 : vector<2x2x128xi1>, vector<2x2x128xf32>
    %c0_11 = arith.constant 0 : index
    %c2 = arith.constant 2 : index
    %c0_12 = arith.constant 0 : index
    %c0_13 = arith.constant 0 : index
    %13 = vector.load %arg2[%c0_11, %c2, %c0_12, %c0_13] : memref<2x4x2x128xf32, #tpu.memory_space<vmem>>, vector<2x1x2x128xf32>
    %14 = vector.shape_cast %13 : vector<2x1x2x128xf32> to vector<2x2x128xf32>
    %15 = arith.cmpf ogt, %14, %10 : vector<2x2x128xf32>
    %16 = arith.select %15, %14, %10 : vector<2x2x128xi1>, vector<2x2x128xf32>
    %cst_14 = arith.constant 0.880797088 : f32
    %17 = vector.broadcast %cst_14 : f32 to vector<2x2x128xf32>
    %18 = arith.select %15, %17, %12 : vector<2x2x128xi1>, vector<2x2x128xf32>
    %c0_15 = arith.constant 0 : index
    %c3 = arith.constant 3 : index
    %c0_16 = arith.constant 0 : index
    %c0_17 = arith.constant 0 : index
    %19 = vector.load %arg2[%c0_15, %c3, %c0_16, %c0_17] : memref<2x4x2x128xf32, #tpu.memory_space<vmem>>, vector<2x1x2x128xf32>
    %20 = vector.shape_cast %19 : vector<2x1x2x128xf32> to vector<2x2x128xf32>
    %21 = arith.cmpf ogt, %20, %16 : vector<2x2x128xf32>
    %cst_18 = arith.constant 0.952574133 : f32
    %22 = vector.broadcast %cst_18 : f32 to vector<2x2x128xf32>
    %23 = arith.select %21, %22, %18 : vector<2x2x128xi1>, vector<2x2x128xf32>
    %c0_19 = arith.constant 0 : index
    %c0_20 = arith.constant 0 : index
    %c0_21 = arith.constant 0 : index
    %24 = vector.load %arg4[%c0_19, %c0_20, %c0_21] : memref<1x2x128xf32, #tpu.memory_space<vmem>>, vector<1x2x128xf32>
    %25 = arith.mulf %23, %3 : vector<2x2x128xf32>
    %cst_22 = arith.constant dense<0.000000e+00> : vector<2x128xf32>
    %26 = vector.multi_reduction <add>, %25, %cst_22 [1] : vector<2x2x128xf32> to vector<2x128xf32>
    %27 = vector.shape_cast %26 : vector<2x128xf32> to vector<1x2x128xf32>
    %28 = arith.addf %24, %27 : vector<1x2x128xf32>
    %c0_23 = arith.constant 0 : index
    %c0_24 = arith.constant 0 : index
    %c0_25 = arith.constant 0 : index
    %29 = vector.load %arg4[%c0_23, %c0_24, %c0_25] : memref<1x2x128xf32, #tpu.memory_space<vmem>>, vector<1x2x128xf32>
    tpu.vector_store %arg4[%c0_23, %c0_24, %c0_25], %28 {strides = array<i32>} : memref<1x2x128xf32, #tpu.memory_space<vmem>>, vector<1x2x128xf32>,
    %c0_26 = arith.constant 0 : index
    %c0_27 = arith.constant 0 : index
    %c0_28 = arith.constant 0 : index
    %30 = vector.load %arg5[%c0_26, %c0_27, %c0_28] : memref<1x2x128xf32, #tpu.memory_space<vmem>>, vector<1x2x128xf32>
    %cst_29 = arith.constant dense<0.000000e+00> : vector<2x128xf32>
    %31 = vector.multi_reduction <add>, %23, %cst_29 [1] : vector<2x2x128xf32> to vector<2x128xf32>
    %32 = vector.shape_cast %31 : vector<2x128xf32> to vector<1x2x128xf32>
    %33 = arith.addf %30, %32 : vector<1x2x128xf32>
    %c0_30 = arith.constant 0 : index
    %c0_31 = arith.constant 0 : index
    %c0_32 = arith.constant 0 : index
    %34 = vector.load %arg5[%c0_30, %c0_31, %c0_32] : memref<1x2x128xf32, #tpu.memory_space<vmem>>, vector<1x2x128xf32>
    tpu.vector_store %arg5[%c0_30, %c0_31, %c0_32], %33 {strides = array<i32>} : memref<1x2x128xf32, #tpu.memory_space<vmem>>, vector<1x2x128xf32>,
    %c0_33 = arith.constant 0 : index
    %c0_34 = arith.constant 0 : index
    %c0_35 = arith.constant 0 : index
    %35 = vector.load %arg6[%c0_33, %c0_34, %c0_35] : memref<1x2x128xf32, #tpu.memory_space<vmem>>, vector<1x2x128xf32>
    %cst_36 = arith.constant dense<0.000000e+00> : vector<2x128xf32>
    %36 = vector.multi_reduction <add>, %3, %cst_36 [1] : vector<2x2x128xf32> to vector<2x128xf32>
    %37 = vector.shape_cast %36 : vector<2x128xf32> to vector<1x2x128xf32>
    %38 = arith.addf %35, %37 : vector<1x2x128xf32>
    %c0_37 = arith.constant 0 : index
    %c0_38 = arith.constant 0 : index
    %c0_39 = arith.constant 0 : index
    %39 = vector.load %arg6[%c0_37, %c0_38, %c0_39] : memref<1x2x128xf32, #tpu.memory_space<vmem>>, vector<1x2x128xf32>
    tpu.vector_store %arg6[%c0_37, %c0_38, %c0_39], %38 {strides = array<i32>} : memref<1x2x128xf32, #tpu.memory_space<vmem>>, vector<1x2x128xf32>,
    return
  }
  func.func @transform_0(%arg0: i32, %arg1: i32) -> (i32, i32, i32, i32) {
    %c1_i32 = arith.constant 1 : i32
    %0 = arith.muli %arg0, %c1_i32 : i32
    %1 = arith.addi %0, %arg1 : i32
    %c0_i32 = arith.constant 0 : i32
    %c0_i32_0 = arith.constant 0 : i32
    %c0_i32_1 = arith.constant 0 : i32
    %c0_i32_2 = arith.constant 0 : i32
    return %c0_i32, %c0_i32_0, %1, %c0_i32_1 : i32, i32, i32, i32
  }
  func.func @transform_1(%arg0: i32, %arg1: i32) -> (i32, i32, i32) {
    %c1_i32 = arith.constant 1 : i32
    %0 = arith.muli %arg0, %c1_i32 : i32
    %1 = arith.addi %0, %arg1 : i32
    %c0_i32 = arith.constant 0 : i32
    %c0_i32_0 = arith.constant 0 : i32
    %c0_i32_1 = arith.constant 0 : i32
    return %c0_i32, %1, %c0_i32_0 : i32, i32, i32
  }
  func.func @transform_2(%arg0: i32, %arg1: i32) -> (i32, i32, i32) {
    %c0_i32 = arith.constant 0 : i32
    %c0_i32_0 = arith.constant 0 : i32
    %c0_i32_1 = arith.constant 0 : i32
    return %arg0, %c0_i32, %c0_i32_0 : i32, i32, i32
  }
  func.func @transform_3(%arg0: i32, %arg1: i32) -> (i32, i32, i32) {
    %c0_i32 = arith.constant 0 : i32
    %c0_i32_0 = arith.constant 0 : i32
    %c0_i32_1 = arith.constant 0 : i32
    return %arg0, %c0_i32, %c0_i32_0 : i32, i32, i32
  }
  func.func @transform_4(%arg0: i32, %arg1: i32) -> (i32, i32, i32) {
    %c0_i32 = arith.constant 0 : i32
    %c0_i32_0 = arith.constant 0 : i32
    %c0_i32_1 = arith.constant 0 : i32
    return %arg0, %c0_i32, %c0_i32_0 : i32, i32, i32
  }
}

</mosaic_0001>

<llo_original>
// kernel: tpu_custom_call.1
$region0: #{tpu_custom_call.1}
  #allocation0 [shape = 'u32[]', space=smem, size = 0x4, offset = 0x4, fixed_abs, tag = 'smem constant byte address 0x4 - core index']
  #allocation1 [shape = 'u32[144,128]{1,0:T(1,128)}', space=vmem, size = 0x12000, scoped, tag = 'internal scratch']
  %s0 = inlined_call_operand.hbm [shape: f32[2,4,2,128], index: 0, kind: input, shape index: {}]
  %s1 = inlined_call_operand.hbm [shape: f32[2,2,128], index: 1, kind: input, shape index: {}]
  %s2 = inlined_call_operand.hbm [shape: f32[1,2,128], index: 2, kind: output, shape index: {0}]
  %s3 = inlined_call_operand.hbm [shape: f32[1,2,128], index: 3, kind: output, shape index: {1}]
  %s4 = inlined_call_operand.hbm [shape: f32[1,2,128], index: 4, kind: output, shape index: {2}]
  %5 = xla_tuple %s2, %s3, %s4
  %s6 = sld [smem:[#allocation0]]
  $region46: #{tpu_custom_call.1} parent=0
    _
  %s8 = ssub.s32 1, %s6
  %s9 = scalar_select 0, %s8, %s6
  $region1: #{tpu_custom_call.1} parent=0
    #allocation2 [shape = 'u8[8192]{0}', space=vmem, size = 0x2000, scoped, tag = 'input window, operand 0, single buffered']
    #allocation3 [shape = 's32[1]{0}', space=sflag, size = 0x4, scoped, tag = 'scoped memory for tpu_custom_call.1']
    #allocation4 [shape = 's32[1]{0}', space=sflag, size = 0x4, scoped, tag = 'scoped memory for tpu_custom_call.1']
    #allocation5 [shape = 'u8[2048]{0}', space=vmem, size = 0x800, scoped, tag = 'input window, operand 1, single buffered']
    #allocation6 [shape = 's32[1]{0}', space=sflag, size = 0x4, scoped, tag = 'scoped memory for tpu_custom_call.1']
    #allocation7 [shape = 'u8[1024]{0}', space=vmem, size = 0x400, scoped, tag = 'output window, operand 0, single buffered']
    #allocation8 [shape = 'u8[1024]{0}', space=vmem, size = 0x400, scoped, tag = 'output window, operand 1, single buffered']
    #allocation9 [shape = 's32[1]{0}', space=sflag, size = 0x4, scoped, tag = 'scoped memory for tpu_custom_call.1']
    #allocation10 [shape = 'u8[1024]{0}', space=vmem, size = 0x400, scoped, tag = 'output window, operand 2, single buffered']
    %10 = vsyncpa [#allocation3], 0
    %11 = vsyncpa [#allocation6], 0
    %12 = vsyncpa [#allocation4], 0
    %13 = vsyncpa [#allocation9], 0
    // Predicated region
    $region2: #{tpu_custom_call.1} parent=1 // pred_check
      _
    $region3: #{tpu_custom_call.1} parent=1 // pred_check_branch
      %15 = sbr.rel (0) target = $region5
    $region4: #{tpu_custom_call.1} parent=1 // pred_region
      %s16 = sadd.s32 0, 0
      %s18 = ssub.s32 256, 256
      %19 = vsyncadd [#allocation3], %s18
      %s20 = smul.addr %s16, 32
      %s21 = scalar_lea.hbm %s0, %s20
      %s22 = sshll.u32 [#allocation2], 4
      %s23 = int_to_ptr.vmem [resolvable:$true] %s22
      %28 = dma.hbm_to_vmem [thread:$0]  %s21, 256, %s23, [#allocation3], 32, 32, 2
    $region5: #{tpu_custom_call.1} parent=1 // pred_fallthru
      _
    // Predicated region
    $region6: #{tpu_custom_call.1} parent=1 // pred_check
      _
    $region7: #{tpu_custom_call.1} parent=1 // pred_check_branch
      %30 = sbr.rel (0) target = $region9
    $region8: #{tpu_custom_call.1} parent=1 // pred_region
      %s31 = sadd.s32 0, 0
      %s33 = ssub.s32 64, 64
      %34 = vsyncadd [#allocation6], %s33
      %s35 = smul.addr %s31, 32
      %s36 = scalar_lea.hbm %s1, %s35
      %s37 = sshll.u32 [#allocation5], 4
      %s38 = int_to_ptr.vmem [resolvable:$true] %s37
      %43 = dma.hbm_to_vmem [thread:$0]  %s36, 64, %s38, [#allocation6], 32, 32, 2
    $region9: #{tpu_custom_call.1} parent=1 // pred_fallthru
      _
    // Predicated region
    $region10: #{tpu_custom_call.1} parent=1 // pred_check
      _
    $region11: #{tpu_custom_call.1} parent=1 // pred_check_branch
      %45 = sbr.rel (0) target = $region13
    $region12: #{tpu_custom_call.1} parent=1 // pred_region
      %46 = dma.done [#allocation3], 256
    $region13: #{tpu_custom_call.1} parent=1 // pred_fallthru
      _
    // Predicated region
    $region14: #{tpu_custom_call.1} parent=1 // pred_check
      _
    $region15: #{tpu_custom_call.1} parent=1 // pred_check_branch
      %48 = sbr.rel (0) target = $region17
    $region16: #{tpu_custom_call.1} parent=1 // pred_region
      %49 = dma.done [#allocation6], 64
    $region17: #{tpu_custom_call.1} parent=1 // pred_fallthru
      _
    %s50 = sadd.s32 0, 0
    %s51 = sadd.s32 0, 0
    %p52 = scmp.eq.s32.totalorder 0, 0
    // Predicated region
    $region18: #{tpu_custom_call.1} parent=1 // pred_check
      %p53 = pneg %p52
    $region19: #{tpu_custom_call.1} parent=1 // pred_check_branch
      %55 = sbr.rel (%p53) target = $region21
    $region20: #{tpu_custom_call.1} parent=1 // pred_region
      %56 = vst [vmem:[#allocation7] sm:$0x3] 0.0
      %57 = vst [vmem:[#allocation8] sm:$0x3] 0.0
      %58 = vst [vmem:[#allocation10] sm:$0x3] 0.0
    $region21: #{tpu_custom_call.1} parent=1 // pred_fallthru
      _
    %v59 = vld [vmem:[#allocation5] sm:$0x3]
    %v60 = vld [vmem:[#allocation5 + $0x2] sm:$0x3]
    %v61 = vld [vmem:[#allocation2] sm:$0x3]
    %v62 = vld [vmem:[#allocation2 + $0x8] sm:$0x3]
    %s63 = scalar_lea.vmem [#allocation2], 2
    %v64 = vld [vmem:[%s63] sm:$0x3]
    %v65 = vld [vmem:[%s63 + $0x8] sm:$0x3]
    %vm66 = vcmp.gt.f32.partialorder %v64, %v61
    %vm67 = vcmp.gt.f32.partialorder %v65, %v62
    %v68 = vsel %vm66, %v64, %v61
    %v69 = vsel %vm67, %v65, %v62
    %v70 = vsel %vm66, 0.7310586, 0.5
    %v71 = vsel %vm67, 0.7310586, 0.5
    %s72 = scalar_lea.vmem [#allocation2], 4
    %v73 = vld [vmem:[%s72] sm:$0x3]
    %v74 = vld [vmem:[%s72 + $0x8] sm:$0x3]
    %vm75 = vcmp.gt.f32.partialorder %v73, %v68
    %vm76 = vcmp.gt.f32.partialorder %v74, %v69
    %v77 = vsel %vm75, %v73, %v68
    %v78 = vsel %vm76, %v74, %v69
    %v79 = vsel %vm75, 0.8807971, %v70
    %v80 = vsel %vm76, 0.8807971, %v71
    %s81 = scalar_lea.vmem [#allocation2], 6
    %v82 = vld [vmem:[%s81] sm:$0x3]
    %v83 = vld [vmem:[%s81 + $0x8] sm:$0x3]
    %vm84 = vcmp.gt.f32.partialorder %v82, %v77
    %vm85 = vcmp.gt.f32.partialorder %v83, %v78
    %v86 = vsel %vm84, 0.95257413, %v79
    %v87 = vsel %vm85, 0.95257413, %v80
    %v88 = vld [vmem:[#allocation7] sm:$0x3]
    %v89 = vmul.f32 %v86, %v59
    %v90 = vmul.f32 %v87, %v60
    %vm91 = vcmask 1041408
    %v92 = vsel %vm91, %v89, 0.0
    %v93 = vrot.slane %v92, 4
    %v94 = vadd.f32 %v92, %v93
    %v95 = vrot.slane %v94, 2
    %v96 = vadd.f32 %v94, %v95
    %v97 = vrot.slane %v96, 1
    %v98 = vadd.f32 %v96, %v97
    %v99 = vsel %vm91, %v90, 0.0
    %v100 = vrot.slane %v99, 4
    %v101 = vadd.f32 %v99, %v100
    %v102 = vrot.slane %v101, 2
    %v103 = vadd.f32 %v101, %v102
    %v104 = vrot.slane %v103, 1
    %v105 = vadd.f32 %v103, %v104
    %vm108 = vcmask 1041409
    %v109 = vsel %vm108, %v105, %v98
    %v111 = vadd.f32 %v88, %v109
    %112 = vst [vmem:[#allocation7] sm:$0x3] %v111
    %v113 = vld [vmem:[#allocation8] sm:$0x3]
    %v114 = vsel %vm91, %v86, 0.0
    %v115 = vrot.slane %v114, 4
    %v116 = vadd.f32 %v114, %v115
    %v117 = vrot.slane %v116, 2
    %v118 = vadd.f32 %v116, %v117
    %v119 = vrot.slane %v118, 1
    %v120 = vadd.f32 %v118, %v119
    %v121 = vsel %vm91, %v87, 0.0
    %v122 = vrot.slane %v121, 4
    %v123 = vadd.f32 %v121, %v122
    %v124 = vrot.slane %v123, 2
    %v125 = vadd.f32 %v123, %v124
    %v126 = vrot.slane %v125, 1
    %v127 = vadd.f32 %v125, %v126
    %v130 = vsel %vm108, %v127, %v120
    %v132 = vadd.f32 %v113, %v130
    %133 = vst [vmem:[#allocation8] sm:$0x3] %v132
    %v134 = vld [vmem:[#allocation10] sm:$0x3]
    %v135 = vsel %vm91, %v59, 0.0
    %v136 = vrot.slane %v135, 4
    %v137 = vadd.f32 %v135, %v136
    %v138 = vrot.slane %v137, 2
    %v139 = vadd.f32 %v137, %v138
    %v140 = vrot.slane %v139, 1
    %v141 = vadd.f32 %v139, %v140
    %v142 = vsel %vm91, %v60, 0.0
    %v143 = vrot.slane %v142, 4
    %v144 = vadd.f32 %v142, %v143
    %v145 = vrot.slane %v144, 2
    %v146 = vadd.f32 %v144, %v145
    %v147 = vrot.slane %v146, 1
    %v148 = vadd.f32 %v146, %v147
    %v151 = vsel %vm108, %v148, %v141
    %v153 = vadd.f32 %v134, %v151
    %154 = vst [vmem:[#allocation10] sm:$0x3] %v153
    // Predicated region
    $region22: #{tpu_custom_call.1} parent=1 // pred_check
      _
    $region23: #{tpu_custom_call.1} parent=1 // pred_check_branch
      %156 = sbr.rel (0) target = $region25
    $region24: #{tpu_custom_call.1} parent=1 // pred_region
      %s158 = ssub.s32 32, 32
      %159 = vsyncadd [#allocation4], %s158
      %s161 = sshll.u32 [#allocation7], 4
      %s162 = int_to_ptr.vmem [resolvable:$true] %s161
      %164 = dma.vmem_to_hbm [thread:$0]  %s162, 32, %s2, [#allocation4]
    $region25: #{tpu_custom_call.1} parent=1 // pred_fallthru
      _
    // Predicated region
    $region26: #{tpu_custom_call.1} parent=1 // pred_check
      _
    $region27: #{tpu_custom_call.1} parent=1 // pred_check_branch
      %166 = sbr.rel (0) target = $region29
    $region28: #{tpu_custom_call.1} parent=1 // pred_region
      %s168 = ssub.s32 32, 32
      %169 = vsyncadd [#allocation9], %s168
      %s171 = sshll.u32 [#allocation8], 4
      %s172 = int_to_ptr.vmem [resolvable:$true] %s171
      %174 = dma.vmem_to_hbm [thread:$0]  %s172, 32, %s3, [#allocation9]
    $region29: #{tpu_custom_call.1} parent=1 // pred_fallthru
      _
    // Predicated region
    $region30: #{tpu_custom_call.1} parent=1 // pred_check
      _
    $region31: #{tpu_custom_call.1} parent=1 // pred_check_branch
      %176 = sbr.rel (0) target = $region33
    $region32: #{tpu_custom_call.1} parent=1 // pred_region
      %s178 = ssub.s32 32, 32
      %179 = vsyncadd [#allocation9], %s178
      %s181 = sshll.u32 [#allocation10], 4
      %s182 = int_to_ptr.vmem [resolvable:$true] %s181
      %184 = dma.vmem_to_hbm [thread:$0]  %s182, 32, %s4, [#allocation9]
    $region33: #{tpu_custom_call.1} parent=1 // pred_fallthru
      _
    // Predicated region
    $region34: #{tpu_custom_call.1} parent=1 // pred_check
      _
    $region35: #{tpu_custom_call.1} parent=1 // pred_check_branch
      %186 = sbr.rel (0) target = $region37
    $region36: #{tpu_custom_call.1} parent=1 // pred_region
      %187 = dma.done [#allocation4], 32
    $region37: #{tpu_custom_call.1} parent=1 // pred_fallthru
      _
    // Predicated region
    $region38: #{tpu_custom_call.1} parent=1 // pred_check
      _
    $region39: #{tpu_custom_call.1} parent=1 // pred_check_branch
      %189 = sbr.rel (0) target = $region41
    $region40: #{tpu_custom_call.1} parent=1 // pred_region
      %190 = dma.done [#allocation9], 32
    $region41: #{tpu_custom_call.1} parent=1 // pred_fallthru
      _
    // Predicated region
    $region42: #{tpu_custom_call.1} parent=1 // pred_check
      _
    $region43: #{tpu_custom_call.1} parent=1 // pred_check_branch
      %192 = sbr.rel (0) target = $region45
    $region44: #{tpu_custom_call.1} parent=1 // pred_region
      %193 = dma.done [#allocation9], 32
    $region45: #{tpu_custom_call.1} parent=1 // pred_fallthru
      _
    %194 = vsyncpa [#allocation3], 1
    %195 = vsyncpa [#allocation6], 1
    %196 = vsyncpa [#allocation4], 1
    %197 = vsyncpa [#allocation9], 1

</llo_original>
